<compile_context>
chip_gen: v6e
topology: v6e:2x2x1
jax: 0.10.0
libtpu: 0.0.40
codegen_flags: <defaults>
</compile_context>

<pallas_src>
import math

import jax
import jax.numpy as jnp
from jax.experimental import pallas as pl
from jax.experimental.pallas import tpu as pltpu


def _gmm_kernel(z_ref, lstack_ref, seg_ref, wlin_ref, cst_ref, out_ref):
    # z tile is [TB, D]; put the batch on the LANE axis (in-kernel transpose,
    # XLU is otherwise idle).  All downstream slabs are lane-dense.
    zt = z_ref[...].T                                       # [D, TB]
    lstack = lstack_ref[...]                                # [K*D, D] rows = sqrt(.5)*C_k^{-1}
    seg = seg_ref[...]                                      # [K, K*D]  segment indicator
    wlin = wlin_ref[...]                                    # [K, D]    rows = P_k @ mu_k
    cst = cst_ref[...]                                      # [K, 1]    folded constants

    # y[k*D+d, b] = sqrt(.5) * (C_k^{-1} z_b)[d]            (MXU)
    y = jnp.dot(lstack, zt, preferred_element_type=jnp.float32)      # [K*D, TB]
    # 0.5 * z_b^T P_k z_b, segment-reduced on the MXU        (MXU)
    quad = jnp.dot(seg, y * y, preferred_element_type=jnp.float32)   # [K, TB]
    # z_b . (P_k mu_k)                                       (MXU)
    lin = jnp.dot(wlin, zt, preferred_element_type=jnp.float32)      # [K, TB]

    log_p = lin - quad + cst                                # [K, TB]

    # logsumexp over the K components (sublane axis), numerically stable.
    m = jnp.max(log_p, axis=0, keepdims=True)               # [1, TB]
    lse = m + jnp.log(jnp.sum(jnp.exp(log_p - m), axis=0, keepdims=True))
    out_ref[...] = lse.astype(out_ref.dtype)                # lane-dense [1, TB]


def _gmm_params(pi, mu, cov_raw):
    """Build the lane-dense kernel parameters in f32 (tiny K x D x D algebra)."""
    K, D = mu.shape
    pi = pi.astype(jnp.float32)
    mu = mu.astype(jnp.float32)
    cov_raw = cov_raw.astype(jnp.float32)

    eye = jnp.eye(D, dtype=jnp.float32)
    cov = cov_raw @ jnp.swapaxes(cov_raw, -1, -2) + 0.01 * eye[None]    # [K, D, D]
    chol = jnp.linalg.cholesky(cov)                                     # C_k (lower)
    logdet = 2.0 * jnp.sum(
        jnp.log(jnp.diagonal(chol, axis1=-2, axis2=-1)), axis=-1)       # [K]
    # C_k^{-1} via triangular solve; P_k = C_k^{-T} C_k^{-1}.
    cinv = jax.vmap(
        lambda c: jax.scipy.linalg.solve_triangular(c, eye, lower=True))(chol)

    log_mix = jax.nn.log_softmax(pi)                                    # [K]
    cm = jnp.einsum("kde,ke->kd", cinv, mu)                             # C^{-1} mu     [K, D]
    pmu = jnp.einsum("kdi,kd->ki", cinv, cm)                            # P mu          [K, D]
    mu_p_mu = jnp.sum(cm * cm, axis=-1)                                 # mu^T P mu     [K]
    cst = log_mix - 0.5 * (logdet + mu_p_mu + D * math.log(2.0 * math.pi))

    lstack = (math.sqrt(0.5) * cinv).reshape(K * D, D)                  # [K*D, D]
    seg = jnp.repeat(jnp.eye(K, dtype=jnp.float32), D, axis=1)          # [K, K*D]
    return lstack, seg, pmu, cst.reshape(K, 1)


def _tpu_vmem_bytes():
    try:
        return int(pltpu.get_tpu_info().vmem_capacity_bytes)
    except Exception:
        return 64 << 20  # conservative (v7x-sized) fallback


def gmm_log_likelihood(z, pi, mu, cov_raw, *, block_b=8192):
    """z: [B, D]; pi: [K]; mu: [K, D]; cov_raw: [K, D, D]. Returns [B]."""
    B, D = z.shape
    K = pi.shape[0]

    lstack, seg, wlin, cst = _gmm_params(pi, mu, cov_raw)
    z = z.astype(jnp.float32)

    # --- tile sizing ---------------------------------------------------------
    # Rough live-VMEM bytes per batch element (f32):
    #   input [TB, D] tile lane-padded to 128, double-buffered      ~1024
    #   transposed [D, TB] + y + y*y + small [K, TB] slabs + output ~1300
    bytes_per_sample = 2560
    vmem_cap = _tpu_vmem_bytes()                        # 128 MiB v5e/v6e, 64 MiB v7x
    vmem_budget = min((vmem_cap * 3) // 4, 96 << 20)
    max_block = max(128, (vmem_budget // bytes_per_sample) // 128 * 128)

    block_b = max(128, (block_b // 128) * 128)
    block_b = min(block_b, max_block)
    # Keep >= 2 grid steps when the batch allows it (shards the parallel batch
    # axis across both v7x TensorCores; mild/no overhead on 1-TC chips).
    block_b = min(block_b, max(128, pl.cdiv(B, 2 * 128) * 128))
    grid_b = pl.cdiv(B, block_b)

    out = pl.pallas_call(
        _gmm_kernel,
        out_shape=jax.ShapeDtypeStruct((1, B), jnp.float32),
        grid=(grid_b,),
        in_specs=[
            pl.BlockSpec((block_b, D), lambda i: (i, 0)),    # z tile (rows of [B, D])
            pl.BlockSpec((K * D, D), lambda i: (0, 0)),      # stacked sqrt(.5)*C^{-1}
            pl.BlockSpec((K, K * D), lambda i: (0, 0)),      # segment indicator
            pl.BlockSpec((K, D), lambda i: (0, 0)),          # P_k mu_k
            pl.BlockSpec((K, 1), lambda i: (0, 0)),          # folded constants
        ],
        out_specs=pl.BlockSpec((1, block_b), lambda i: (0, i)),  # lane-dense row
        compiler_params=pltpu.CompilerParams(
            dimension_semantics=("parallel",),
            vmem_limit_bytes=int(vmem_budget)),
    )(z, lstack, seg, wlin, cst)
    return out[0]


def gmm_log_likelihood_ref(z, pi, mu, cov_raw):
    """Pure-JAX reference mirroring the PyTorch forward (for verification)."""
    B, D = z.shape
    eye = jnp.eye(D, dtype=jnp.float32)
    cov = cov_raw @ jnp.swapaxes(cov_raw, -1, -2) + 0.01 * eye[None]
    chol = jnp.linalg.cholesky(cov)
    logdet = 2.0 * jnp.sum(jnp.log(jnp.diagonal(chol, axis1=-2, axis2=-1)), axis=-1)
    prec = jnp.linalg.inv(cov)
    diff = z[:, None, :] - mu[None, :, :]                    # [B, K, D]
    quad = jnp.einsum("bkd,kde,bke->bk", diff, prec, diff)
    log_p = (-0.5 * (quad + logdet[None, :] + D * math.log(2.0 * math.pi))
             + jax.nn.log_softmax(pi)[None, :])
    return jax.scipy.special.logsumexp(log_p, axis=1)


if __name__ == "__main__":
    # Small, TPU-friendly shapes consistent with the module's forward:
    # B samples of embedding dimension D, K mixture components.
    B, D, K = 256, 16, 8

    key = jax.random.PRNGKey(0)
    kz, kmu, kcov = jax.random.split(key, 3)

    # Deterministic synthetic parameters (shapes per GMM.__init__):
    z = jax.random.normal(kz, (B, D), dtype=jnp.float32)
    pi = jnp.ones((K,), dtype=jnp.float32) / K
    mu = jax.random.normal(kmu, (K, D), dtype=jnp.float32)
    # __init__ uses identity cov_raw; add a small deterministic perturbation so
    # the full (non-diagonal) precision path in the kernel is exercised.
    cov_raw = (jnp.eye(D, dtype=jnp.float32)[None].repeat(K, axis=0)
               + 0.05 * jax.random.normal(kcov, (K, D, D), dtype=jnp.float32))

    out = gmm_log_likelihood(z, pi, mu, cov_raw)
    out = jax.block_until_ready(out)

    ref = gmm_log_likelihood_ref(z, pi, mu, cov_raw)
    assert out.shape == (B,)
    assert jnp.allclose(out, ref, atol=1e-3, rtol=1e-3), (
        f"mismatch: max abs err {jnp.max(jnp.abs(out - ref))}")

    print("KERNEL_OK")
</pallas_src>

<mosaic_0001>
module attributes {stable_mosaic.version = 11 : i64} {
  func.func @_gmm_kernel(%arg0: i32, %arg1: memref<128x16xf32, #tpu.memory_space<vmem>>, %arg2: memref<128x16xf32, #tpu.memory_space<vmem>>, %arg3: memref<8x128xf32, #tpu.memory_space<vmem>>, %arg4: memref<8x16xf32, #tpu.memory_space<vmem>>, %arg5: memref<8x1xf32, #tpu.memory_space<vmem>>, %arg6: memref<1x128xf32, #tpu.memory_space<vmem>>) attributes {dimension_semantics = [#tpu.dimension_semantics<parallel>], iteration_bounds = array<i64: 2>, scalar_prefetch = 0 : i64, scratch_operands = 0 : i64, tpu.core_type = #tpu.core_type<tc>, window_params = [{transform_indices = @transform_0, window_bounds = array<i64: 128, 16>}, {pipeline_mode = #tpu.pipeline_mode<synchronous>, transform_indices = @transform_1, window_bounds = array<i64: 128, 16>}, {pipeline_mode = #tpu.pipeline_mode<synchronous>, transform_indices = @transform_2, window_bounds = array<i64: 8, 128>}, {pipeline_mode = #tpu.pipeline_mode<synchronous>, transform_indices = @transform_3, window_bounds = array<i64: 8, 16>}, {pipeline_mode = #tpu.pipeline_mode<synchronous>, transform_indices = @transform_4, window_bounds = array<i64: 8, 1>}, {transform_indices = @transform_5, window_bounds = array<i64: 1, 128>}]} {
    %c0 = arith.constant 0 : index
    %c0_0 = arith.constant 0 : index
    %0 = vector.load %arg1[%c0, %c0_0] : memref<128x16xf32, #tpu.memory_space<vmem>>, vector<128x16xf32>
    %1 = tpu.transpose %0, [1, 0] : vector<128x16xf32> -> vector<16x128xf32>
    %c0_1 = arith.constant 0 : index
    %c0_2 = arith.constant 0 : index
    %2 = vector.load %arg2[%c0_1, %c0_2] : memref<128x16xf32, #tpu.memory_space<vmem>>, vector<128x16xf32>
    %c0_3 = arith.constant 0 : index
    %c0_4 = arith.constant 0 : index
    %3 = vector.load %arg3[%c0_3, %c0_4] : memref<8x128xf32, #tpu.memory_space<vmem>>, vector<8x128xf32>
    %c0_5 = arith.constant 0 : index
    %c0_6 = arith.constant 0 : index
    %4 = vector.load %arg4[%c0_5, %c0_6] : memref<8x16xf32, #tpu.memory_space<vmem>>, vector<8x16xf32>
    %c0_7 = arith.constant 0 : index
    %c0_8 = arith.constant 0 : index
    %5 = vector.load %arg5[%c0_7, %c0_8] : memref<8x1xf32, #tpu.memory_space<vmem>>, vector<8x1xf32>
    %cst = arith.constant dense<0.000000e+00> : vector<128x128xf32>
    %6 = tpu.matmul %2, %1, %cst {dimension_numbers = #tpu.dot_dimension_numbers<[1], [0], [0], [1], [0, 0, 1, 1], [], []>} : vector<128x16xf32>, vector<16x128xf32>, vector<128x128xf32> -> vector<128x128xf32>
    %7 = arith.mulf %6, %6 : vector<128x128xf32>
    %cst_9 = arith.constant dense<0.000000e+00> : vector<8x128xf32>
    %8 = tpu.matmul %3, %7, %cst_9 {dimension_numbers = #tpu.dot_dimension_numbers<[1], [0], [0], [1], [0, 0, 1, 1], [], []>} : vector<8x128xf32>, vector<128x128xf32>, vector<8x128xf32> -> vector<8x128xf32>
    %cst_10 = arith.constant dense<0.000000e+00> : vector<8x128xf32>
    %9 = tpu.matmul %4, %1, %cst_10 {dimension_numbers = #tpu.dot_dimension_numbers<[1], [0], [0], [1], [0, 0, 1, 1], [], []>} : vector<8x16xf32>, vector<16x128xf32>, vector<8x128xf32> -> vector<8x128xf32>
    %10 = arith.subf %9, %8 : vector<8x128xf32>
    %11 = vector.broadcast %5 : vector<8x1xf32> to vector<8x128xf32>
    %12 = arith.addf %10, %11 : vector<8x128xf32>
    %cst_11 = arith.constant dense<0xFF800000> : vector<128xf32>
    %13 = vector.multi_reduction <maximumf>, %12, %cst_11 [0] : vector<8x128xf32> to vector<128xf32>
    %14 = vector.shape_cast %13 : vector<128xf32> to vector<1x128xf32>
    %15 = vector.broadcast %14 : vector<1x128xf32> to vector<8x128xf32>
    %16 = arith.subf %12, %15 : vector<8x128xf32>
    %17 = math.exp %16 : vector<8x128xf32>
    %cst_12 = arith.constant dense<0.000000e+00> : vector<128xf32>
    %18 = vector.multi_reduction <add>, %17, %cst_12 [0] : vector<8x128xf32> to vector<128xf32>
    %19 = vector.shape_cast %18 : vector<128xf32> to vector<1x128xf32>
    %20 = math.log %19 : vector<1x128xf32>
    %21 = arith.addf %14, %20 : vector<1x128xf32>
    %c0_13 = arith.constant 0 : index
    %c0_14 = arith.constant 0 : index
    %22 = vector.load %arg6[%c0_13, %c0_14] : memref<1x128xf32, #tpu.memory_space<vmem>>, vector<1x128xf32>
    tpu.vector_store %arg6[%c0_13, %c0_14], %21 {strides = array<i32>} : memref<1x128xf32, #tpu.memory_space<vmem>>, vector<1x128xf32>,
    return
  }
  func.func @transform_0(%arg0: i32) -> (i32, i32) {
    %c0_i32 = arith.constant 0 : i32
    %c0_i32_0 = arith.constant 0 : i32
    return %arg0, %c0_i32 : i32, i32
  }
  func.func @transform_1(%arg0: i32) -> (i32, i32) {
    %c0_i32 = arith.constant 0 : i32
    %c0_i32_0 = arith.constant 0 : i32
    %c0_i32_1 = arith.constant 0 : i32
    return %c0_i32, %c0_i32_0 : i32, i32
  }
  func.func @transform_2(%arg0: i32) -> (i32, i32) {
    %c0_i32 = arith.constant 0 : i32
    %c0_i32_0 = arith.constant 0 : i32
    %c0_i32_1 = arith.constant 0 : i32
    return %c0_i32, %c0_i32_0 : i32, i32
  }
  func.func @transform_3(%arg0: i32) -> (i32, i32) {
    %c0_i32 = arith.constant 0 : i32
    %c0_i32_0 = arith.constant 0 : i32
    %c0_i32_1 = arith.constant 0 : i32
    return %c0_i32, %c0_i32_0 : i32, i32
  }
  func.func @transform_4(%arg0: i32) -> (i32, i32) {
    %c0_i32 = arith.constant 0 : i32
    %c0_i32_0 = arith.constant 0 : i32
    %c0_i32_1 = arith.constant 0 : i32
    return %c0_i32, %c0_i32_0 : i32, i32
  }
  func.func @transform_5(%arg0: i32) -> (i32, i32) {
    %c0_i32 = arith.constant 0 : i32
    %c0_i32_0 = arith.constant 0 : i32
    return %c0_i32, %arg0 : i32, i32
  }
}

</mosaic_0001>

<llo_original>
// kernel: tpu_custom_call.1
$region0: #{tpu_custom_call.1}
  #allocation0 [shape = 'u32[]', space=smem, size = 0x4, offset = 0x4, fixed_abs, tag = 'smem constant byte address 0x4 - core index']
  #allocation1 [shape = 'u32[144,128]{1,0:T(1,128)}', space=vmem, size = 0x12000, scoped, tag = 'internal scratch']
  %s0 = inlined_call_operand.vmem [shape: f32[256,16], index: 0, kind: input, shape index: {}]
  %s1 = inlined_call_operand.vmem [shape: f32[128,16], index: 1, kind: input, shape index: {}]
  %s2 = inlined_call_operand.vmem [shape: f32[8,128], index: 2, kind: input, shape index: {}]
  %s3 = inlined_call_operand.vmem [shape: f32[8,16], index: 3, kind: input, shape index: {}]
  %s4 = inlined_call_operand.vmem [shape: f32[8,1], index: 4, kind: input, shape index: {}]
  %s5 = inlined_call_operand.hbm [shape: f32[1,256], index: 5, kind: output, shape index: {}]
  %s6 = sld [smem:[#allocation0]]
  $region53: #{tpu_custom_call.1} parent=0
    _
  %s8 = ssub.s32 1, %s6
  %s9 = scalar_select 0, %s8, %s6
  $region1: #{tpu_custom_call.1} parent=0
    #allocation2 [shape = 'u8[1024]{0}', space=vmem, size = 0x400, scoped, tag = 'output window, operand 0']
    #allocation3 [shape = 's32[2]{0}', space=sflag, size = 0x8, scoped, tag = 'scoped memory for tpu_custom_call.1']
    %10 = vsyncpa [#allocation3], 0
    %s11 = scalar_lea.sflag [#allocation3], 1
    %12 = vsyncpa %s11, 0
    loop: start=0, step=1, limit=4
    $region2: #{tpu_custom_call.1} parent=1 // loop_pre_header
      _
    $region3: #{tpu_custom_call.1} parent=1 // loop_header
      %s14 = sphi 0, %s18
      %p15 = scmp.ge.s32.totalorder %s14, 4
      %s24 = sphi 0, %s26
      %s27 = sphi 0, %s24
      %s28 = sphi 0, %s27
      %s44 = sphi 0, %s28
      %s48 = sphi 0, %s48
      %s50 = sphi 0, %s48
      %s51 = sphi 0, %s50
      %s65 = sphi 0, %s51
      %s69 = sphi 0, %s69
      %s71 = sphi 0, %s69
      %s72 = sphi 0, %s71
      %s86 = sphi 0, %s72
      %s90 = sphi 0, %s90
      %s92 = sphi 0, %s90
      %s93 = sphi 0, %s92
      %s107 = sphi 0, %s93
      %s111 = sphi 0, %s111
      %s113 = sphi 0, %s111
      %s114 = sphi 0, %s113
      %s128 = sphi 0, %s114
      %s134 = sphi 0, %s136
      %s137 = sphi 0, %s134
      %s138 = sphi 0, %s137
      %s154 = sphi 0, %s138
    $region4: #{tpu_custom_call.1} parent=1 // loop_header_branch
      %17 = sbr.rel (%p15) target = $region8
    $region5: #{tpu_custom_call.1} parent=1 // loop_body
      %s19 = ssub.s32 %s14, 1
      %s20 = ssub.s32 %s14, 2
      %s21 = sadd.s32 %s14, 1
      %s22 = ssub.s32 %s14, %s21
      %p23 = scmp.eq.s32.totalorder %s22, 0
      %s25 = sadd.s32 %s24, 1
      %s26 = scalar_select %p23, %s24, %s25
      %p29 = pneg %p23
      %p30 = scmp.eq.s32.totalorder %s14, 1
      %p31 = por %p29, %p30
      %p32 = scmp.ne.s32.totalorder %s24, %s27
      %p33 = scmp.eq.s32.totalorder %s14, 0
      %p34 = por %p32, %p33
      %p35 = scmp.ne.s32.totalorder %s24, %s27
      %p36 = scmp.eq.s32.totalorder %s19, 1
      %p37 = por %p35, %p36
      %p38 = scmp.ne.s32.totalorder %s27, %s28
      %p39 = scmp.eq.s32.totalorder %s19, 0
      %p40 = por %p38, %p39
      %p41 = scmp.ne.s32.totalorder %s27, %s28
      %p42 = scmp.eq.s32.totalorder %s20, 1
      %p43 = por %p41, %p42
      %p45 = scmp.ne.s32.totalorder %s28, %s44
      %p46 = scmp.eq.s32.totalorder %s20, 0
      %p47 = por %p45, %p46
      %s49 = sadd.s32 %s48, 1
      %p52 = scmp.eq.s32.totalorder %s14, 1
      %p53 = scmp.ne.s32.totalorder %s48, %s50
      %p54 = scmp.eq.s32.totalorder %s14, 0
      %p55 = por %p53, %p54
      %p56 = scmp.ne.s32.totalorder %s48, %s50
      %p57 = scmp.eq.s32.totalorder %s19, 1
      %p58 = por %p56, %p57
      %p59 = scmp.ne.s32.totalorder %s50, %s51
      %p60 = scmp.eq.s32.totalorder %s19, 0
      %p61 = por %p59, %p60
      %p62 = scmp.ne.s32.totalorder %s50, %s51
      %p63 = scmp.eq.s32.totalorder %s20, 1
      %p64 = por %p62, %p63
      %p66 = scmp.ne.s32.totalorder %s51, %s65
      %p67 = scmp.eq.s32.totalorder %s20, 0
      %p68 = por %p66, %p67
      %s70 = sadd.s32 %s69, 1
      %p73 = scmp.eq.s32.totalorder %s14, 1
      %p74 = scmp.ne.s32.totalorder %s69, %s71
      %p75 = scmp.eq.s32.totalorder %s14, 0
      %p76 = por %p74, %p75
      %p77 = scmp.ne.s32.totalorder %s69, %s71
      %p78 = scmp.eq.s32.totalorder %s19, 1
      %p79 = por %p77, %p78
      %p80 = scmp.ne.s32.totalorder %s71, %s72
      %p81 = scmp.eq.s32.totalorder %s19, 0
      %p82 = por %p80, %p81
      %p83 = scmp.ne.s32.totalorder %s71, %s72
      %p84 = scmp.eq.s32.totalorder %s20, 1
      %p85 = por %p83, %p84
      %p87 = scmp.ne.s32.totalorder %s72, %s86
      %p88 = scmp.eq.s32.totalorder %s20, 0
      %p89 = por %p87, %p88
      %s91 = sadd.s32 %s90, 1
      %p94 = scmp.eq.s32.totalorder %s14, 1
      %p95 = scmp.ne.s32.totalorder %s90, %s92
      %p96 = scmp.eq.s32.totalorder %s14, 0
      %p97 = por %p95, %p96
      %p98 = scmp.ne.s32.totalorder %s90, %s92
      %p99 = scmp.eq.s32.totalorder %s19, 1
      %p100 = por %p98, %p99
      %p101 = scmp.ne.s32.totalorder %s92, %s93
      %p102 = scmp.eq.s32.totalorder %s19, 0
      %p103 = por %p101, %p102
      %p104 = scmp.ne.s32.totalorder %s92, %s93
      %p105 = scmp.eq.s32.totalorder %s20, 1
      %p106 = por %p104, %p105
      %p108 = scmp.ne.s32.totalorder %s93, %s107
      %p109 = scmp.eq.s32.totalorder %s20, 0
      %p110 = por %p108, %p109
      %s112 = sadd.s32 %s111, 1
      %p115 = scmp.eq.s32.totalorder %s14, 1
      %p116 = scmp.ne.s32.totalorder %s111, %s113
      %p117 = scmp.eq.s32.totalorder %s14, 0
      %p118 = por %p116, %p117
      %p119 = scmp.ne.s32.totalorder %s111, %s113
      %p120 = scmp.eq.s32.totalorder %s19, 1
      %p121 = por %p119, %p120
      %p122 = scmp.ne.s32.totalorder %s113, %s114
      %p123 = scmp.eq.s32.totalorder %s19, 0
      %p124 = por %p122, %p123
      %p125 = scmp.ne.s32.totalorder %s113, %s114
      %p126 = scmp.eq.s32.totalorder %s20, 1
      %p127 = por %p125, %p126
      %p129 = scmp.ne.s32.totalorder %s114, %s128
      %p130 = scmp.eq.s32.totalorder %s20, 0
      %p131 = por %p129, %p130
      %s132 = ssub.s32 %s14, %s21
      %p133 = scmp.eq.s32.totalorder %s132, 0
      %s135 = sadd.s32 %s134, 1
      %s136 = scalar_select %p133, %s134, %s135
      %p139 = pneg %p133
      %p140 = scmp.eq.s32.totalorder %s14, 1
      %p141 = por %p139, %p140
      %p142 = scmp.ne.s32.totalorder %s134, %s137
      %p143 = scmp.eq.s32.totalorder %s14, 0
      %p144 = por %p142, %p143
      %p145 = scmp.ne.s32.totalorder %s134, %s137
      %p146 = scmp.eq.s32.totalorder %s19, 1
      %p147 = por %p145, %p146
      %p148 = scmp.ne.s32.totalorder %s137, %s138
      %p149 = scmp.eq.s32.totalorder %s19, 0
      %p150 = por %p148, %p149
      %p151 = scmp.ne.s32.totalorder %s137, %s138
      %p152 = scmp.eq.s32.totalorder %s20, 1
      %p153 = por %p151, %p152
      %p155 = scmp.ne.s32.totalorder %s138, %s154
      %p156 = scmp.eq.s32.totalorder %s20, 0
      %p157 = por %p155, %p156
      %p158 = scmp.le.s32.totalorder 1, %s14
      %p159 = scmp.lt.s32.totalorder %s14, 3
      %p160 = pnand %p158, %p159
      %p161 = pneg %p160
      // Predicated region
      $region9: #{tpu_custom_call.1} parent=5 // pred_check
        _
      $region10: #{tpu_custom_call.1} parent=5 // pred_check_branch
        %163 = sbr.rel (%p160) target = $region12
      $region11: #{tpu_custom_call.1} parent=5 // pred_region
        %s164 = ssub.s32 %s14, 1
        // Predicated region
        $region13: #{tpu_custom_call.1} parent=11 // pred_check
          %p165 = pneg %p61
        $region14: #{tpu_custom_call.1} parent=11 // pred_check_branch
          %167 = sbr.rel (%p165) target = $region16
        $region15: #{tpu_custom_call.1} parent=11 // pred_region
          _
        $region16: #{tpu_custom_call.1} parent=11 // pred_fallthru
          _
        // Predicated region
        $region17: #{tpu_custom_call.1} parent=11 // pred_check
          %p168 = pneg %p82
        $region18: #{tpu_custom_call.1} parent=11 // pred_check_branch
          %170 = sbr.rel (%p168) target = $region20
        $region19: #{tpu_custom_call.1} parent=11 // pred_region
          _
        $region20: #{tpu_custom_call.1} parent=11 // pred_fallthru
          _
        // Predicated region
        $region21: #{tpu_custom_call.1} parent=11 // pred_check
          %p171 = pneg %p103
        $region22: #{tpu_custom_call.1} parent=11 // pred_check_branch
          %173 = sbr.rel (%p171) target = $region24
        $region23: #{tpu_custom_call.1} parent=11 // pred_region
          _
        $region24: #{tpu_custom_call.1} parent=11 // pred_fallthru
          _
        // Predicated region
        $region25: #{tpu_custom_call.1} parent=11 // pred_check
          %p174 = pneg %p124
        $region26: #{tpu_custom_call.1} parent=11 // pred_check_branch
          %176 = sbr.rel (%p174) target = $region28
        $region27: #{tpu_custom_call.1} parent=11 // pred_region
          _
        $region28: #{tpu_custom_call.1} parent=11 // pred_fallthru
          _
      $region12: #{tpu_custom_call.1} parent=5 // pred_fallthru
        _
      %p177 = scmp.lt.s32.totalorder %s14, 2
      // Predicated region
      $region29: #{tpu_custom_call.1} parent=5 // pred_check
        %p178 = pneg %p177
      $region30: #{tpu_custom_call.1} parent=5 // pred_check_branch
        %180 = sbr.rel (%p178) target = $region32
      $region31: #{tpu_custom_call.1} parent=5 // pred_region
        // Predicated region
        $region33: #{tpu_custom_call.1} parent=31 // pred_check
          %p181 = pneg %p34
        $region34: #{tpu_custom_call.1} parent=31 // pred_check_branch
          %183 = sbr.rel (%p181) target = $region36
        $region35: #{tpu_custom_call.1} parent=31 // pred_region
          %s184 = smul.u32 16, %s14
          %p185 = scmp.lt.s32.totalorder %s184, 31
          %s186 = scalar_select %p185, %s184, 31
          %s187 = smul.addr %s186, 8
          %s188 = scalar_lea.vmem %s0, %s187
          %s189 = smul.u32 16, %s14
        $region36: #{tpu_custom_call.1} parent=31 // pred_fallthru
          _
      $region32: #{tpu_custom_call.1} parent=5 // pred_fallthru
        _
      %p190 = scmp.le.s32.totalorder 1, %s14
      %p191 = scmp.lt.s32.totalorder %s14, 3
      %p192 = pnand %p190, %p191
      %p193 = pneg %p192
      // Predicated region
      $region37: #{tpu_custom_call.1} parent=5 // pred_check
        _
      $region38: #{tpu_custom_call.1} parent=5 // pred_check_branch
        %195 = sbr.rel (%p192) target = $region40
      $region39: #{tpu_custom_call.1} parent=5 // pred_region
        %s196 = ssub.s32 %s14, 1
        %s197 = smul.u32 16, %s19
        %p198 = scmp.lt.s32.totalorder %s197, 31
        %s199 = scalar_select %p198, %s197, 31
        %s200 = smul.addr %s199, 8
        %s201 = scalar_lea.vmem %s0, %s200
        %p202 = pneg %p40
        %p203 = pneg %p37
        %p204 = pneg %p61
        %p205 = pneg %p58
        %p206 = pneg %p82
        %p207 = pneg %p79
        %p208 = pneg %p103
        %p209 = pneg %p100
        %p210 = pneg %p124
        %p211 = pneg %p121
        %p212 = pneg %p150
        %p213 = pneg %p147
        %s214 = sand.u32 %s137, 1
        %s215 = scalar_lea.sflag [#allocation3], %s214
        %s216 = sand.u32 %s137, 1
        %s217 = scalar_lea.vmem [#allocation2], %s216
        %s218 = smul.u32 16, %s19
        %p219 = scmp.lt.s32.totalorder %s218, 31
        %s220 = scalar_select %p219, %s218, 31
        %s221 = smul.addr %s220, 8
        %s222 = scalar_lea.vmem %s0, %s221
        %s223 = smul.u32 16, %s19
        %v224 = vld [vmem:[%s222] sm:$0xff]
        %v225 = vld [vmem:[%s222 + $0x8] sm:$0xff]
        %v226 = vld [vmem:[%s222 + $0x10] sm:$0xff]
        %v227 = vld [vmem:[%s222 + $0x18] sm:$0xff]
        %v228 = vld [vmem:[%s222 + $0x20] sm:$0xff]
        %v229 = vld [vmem:[%s222 + $0x28] sm:$0xff]
        %v230 = vld [vmem:[%s222 + $0x30] sm:$0xff]
        %v231 = vld [vmem:[%s222 + $0x38] sm:$0xff]
        %v232 = vld [vmem:[%s222 + $0x40] sm:$0xff]
        %v233 = vld [vmem:[%s222 + $0x48] sm:$0xff]
        %v234 = vld [vmem:[%s222 + $0x50] sm:$0xff]
        %v235 = vld [vmem:[%s222 + $0x58] sm:$0xff]
        %v236 = vld [vmem:[%s222 + $0x60] sm:$0xff]
        %v237 = vld [vmem:[%s222 + $0x68] sm:$0xff]
        %v238 = vld [vmem:[%s222 + $0x70] sm:$0xff]
        %v239 = vld [vmem:[%s222 + $0x78] sm:$0xff]
        %v240 = vld [vmem:[%s1] sm:$0xff]
        %v241 = vld [vmem:[%s1 + $0x8] sm:$0xff]
        %v242 = vld [vmem:[%s1 + $0x10] sm:$0xff]
        %v243 = vld [vmem:[%s1 + $0x18] sm:$0xff]
        %v244 = vld [vmem:[%s1 + $0x20] sm:$0xff]
        %v245 = vld [vmem:[%s1 + $0x28] sm:$0xff]
        %v246 = vld [vmem:[%s1 + $0x30] sm:$0xff]
        %v247 = vld [vmem:[%s1 + $0x38] sm:$0xff]
        %v248 = vld [vmem:[%s1 + $0x40] sm:$0xff]
        %v249 = vld [vmem:[%s1 + $0x48] sm:$0xff]
        %v250 = vld [vmem:[%s1 + $0x50] sm:$0xff]
        %v251 = vld [vmem:[%s1 + $0x58] sm:$0xff]
        %v252 = vld [vmem:[%s1 + $0x60] sm:$0xff]
        %v253 = vld [vmem:[%s1 + $0x68] sm:$0xff]
        %v254 = vld [vmem:[%s1 + $0x70] sm:$0xff]
        %v255 = vld [vmem:[%s1 + $0x78] sm:$0xff]
        %v256 = vld [vmem:[%s2] sm:$0xff]
        %v257 = vld [vmem:[%s3] sm:$0xff]
        %v258 = vld [vmem:[%s4] sm:$0xff]
        %vm259 = vcmask 130048
        %v261 = vsel %vm259, %v240, 0
        %v264 = vsel %vm259, %v241, 0
        %v267 = vsel %vm259, %v242, 0
        %v270 = vsel %vm259, %v243, 0
        %v273 = vsel %vm259, %v244, 0
        %v276 = vsel %vm259, %v245, 0
        %v279 = vsel %vm259, %v246, 0
        %v282 = vsel %vm259, %v247, 0
        %v285 = vsel %vm259, %v248, 0
        %v288 = vsel %vm259, %v249, 0
        %v291 = vsel %vm259, %v250, 0
        %v294 = vsel %vm259, %v251, 0
        %v297 = vsel %vm259, %v252, 0
        %v300 = vsel %vm259, %v253, 0
        %v303 = vsel %vm259, %v254, 0
        %v306 = vsel %vm259, %v255, 0
        %v309 = vsel %vm259, %v224, 0
        %v312 = vsel %vm259, %v225, 0
        %v315 = vsel %vm259, %v226, 0
        %v318 = vsel %vm259, %v227, 0
        %v321 = vsel %vm259, %v228, 0
        %v324 = vsel %vm259, %v229, 0
        %v327 = vsel %vm259, %v230, 0
        %v330 = vsel %vm259, %v231, 0
        %v333 = vsel %vm259, %v232, 0
        %v336 = vsel %vm259, %v233, 0
        %v339 = vsel %vm259, %v234, 0
        %v342 = vsel %vm259, %v235, 0
        %v345 = vsel %vm259, %v236, 0
        %v348 = vsel %vm259, %v237, 0
        %v351 = vsel %vm259, %v238, 0
        %v354 = vsel %vm259, %v239, 0
        %356 = vmatprep.subr.mxu0 0.0
        %357 = vmatpush1.xpose.msra.mxu0 %v354
        %358 = vmatprep.subr.mxu0 0.0
        %359 = vmatpush1.xpose.msra.mxu0 %v351
        %360 = vmatprep.subr.mxu0 0.0
        %361 = vmatpush1.xpose.msra.mxu0 %v348
        %362 = vmatprep.subr.mxu0 0.0
        %363 = vmatpush1.xpose.msra.mxu0 %v345
        %364 = vmatprep.subr.mxu0 0.0
        %365 = vmatpush1.xpose.msra.mxu0 %v342
        %366 = vmatprep.subr.mxu0 0.0
        %367 = vmatpush1.xpose.msra.mxu0 %v339
        %368 = vmatprep.subr.mxu0 0.0
        %369 = vmatpush1.xpose.msra.mxu0 %v336
        %370 = vmatprep.subr.mxu0 0.0
        %371 = vmatpush1.xpose.msra.mxu0 %v333
        %372 = vmatprep.subr.mxu0 0.0
        %373 = vmatpush1.xpose.msra.mxu0 %v330
        %374 = vmatprep.subr.mxu0 0.0
        %375 = vmatpush1.xpose.msra.mxu0 %v327
        %376 = vmatprep.subr.mxu0 0.0
        %377 = vmatpush1.xpose.msra.mxu0 %v324
        %378 = vmatprep.subr.mxu0 0.0
        %379 = vmatpush1.xpose.msra.mxu0 %v321
        %380 = vmatprep.subr.mxu0 0.0
        %381 = vmatpush1.xpose.msra.mxu0 %v318
        %382 = vmatprep.subr.mxu0 0.0
        %383 = vmatpush1.xpose.msra.mxu0 %v315
        %384 = vmatprep.subr.mxu0 0.0
        %385 = vmatpush1.xpose.msra.mxu0 %v312
        %386 = vmatprep.subr.mxu0 0.0
        %387 = vmatpush1.xpose.msra.mxu0 %v309
        %388 = vmatprep.subr.mxu0 0.0
        %389 = vmatpush2.xpose.msra.mxu0 0.0
        %390 = vmatprep.subr.mxu0 0.0
        %391 = vmatpush2.xpose.msra.mxu0 0.0
        %392 = vmatprep.subr.mxu0 0.0
        %393 = vmatpush2.xpose.msra.mxu0 0.0
        %394 = vmatprep.subr.mxu0 0.0
        %395 = vmatpush2.xpose.msra.mxu0 0.0
        %396 = vmatprep.subr.mxu0 0.0
        %397 = vmatpush2.xpose.msra.mxu0 0.0
        %398 = vmatprep.subr.mxu0 0.0
        %399 = vmatpush2.xpose.msra.mxu0 0.0
        %400 = vmatprep.subr.mxu0 0.0
        %401 = vmatpush2.xpose.msra.mxu0 0.0
        %402 = vmatprep.subr.mxu0 0.0
        %403 = vmatpush2.xpose.msra.mxu0 0.0
        %404 = vmatprep.subr.mxu0 0.0
        %405 = vmatpush2.xpose.msra.mxu0 0.0
        %406 = vmatprep.subr.mxu0 0.0
        %407 = vmatpush2.xpose.msra.mxu0 0.0
        %408 = vmatprep.subr.mxu0 0.0
        %409 = vmatpush2.xpose.msra.mxu0 0.0
        %410 = vmatprep.subr.mxu0 0.0
        %411 = vmatpush2.xpose.msra.mxu0 0.0
        %412 = vmatprep.subr.mxu0 0.0
        %413 = vmatpush2.xpose.msra.mxu0 0.0
        %414 = vmatprep.subr.mxu0 0.0
        %415 = vmatpush2.xpose.msra.mxu0 0.0
        %416 = vmatprep.subr.mxu0 0.0
        %417 = vmatpush2.xpose.msra.mxu0 0.0
        %418 = vmatprep.subr.mxu0 0.0
        %419 = vmatpush2.xpose.msra.mxu0 0.0
        %420 = vmatprep.mubr.f32.mxu0 0.0
        %421 = vmatmul.mubr.f32.gmra.mxu0 %v261
        %v422 = vpop.f32.mrf.mxu0
        %v423 = vadd.f32 0.0, %v422
        %v424 = vpop.f32.mrf.mxu0
        %425 = vmatprep.mubr.f32.mxu0 0.0
        %426 = vmatmul.mubr.f32.gmra.mxu0 %v264
        %v427 = vpop.f32.mrf.mxu0
        %v428 = vadd.f32 0.0, %v427
        %v429 = vpop.f32.mrf.mxu0
        %430 = vmatprep.mubr.f32.mxu0 0.0
        %431 = vmatmul.mubr.f32.gmra.mxu0 %v267
        %v432 = vpop.f32.mrf.mxu0
        %v433 = vadd.f32 0.0, %v432
        %v434 = vpop.f32.mrf.mxu0
        %435 = vmatprep.mubr.f32.mxu0 0.0
        %436 = vmatmul.mubr.f32.gmra.mxu0 %v270
        %v437 = vpop.f32.mrf.mxu0
        %v438 = vadd.f32 0.0, %v437
        %v439 = vpop.f32.mrf.mxu0
        %440 = vmatprep.mubr.f32.mxu0 0.0
        %441 = vmatmul.mubr.f32.gmra.mxu0 %v273
        %v442 = vpop.f32.mrf.mxu0
        %v443 = vadd.f32 0.0, %v442
        %v444 = vpop.f32.mrf.mxu0
        %445 = vmatprep.mubr.f32.mxu0 0.0
        %446 = vmatmul.mubr.f32.gmra.mxu0 %v276
        %v447 = vpop.f32.mrf.mxu0
        %v448 = vadd.f32 0.0, %v447
        %v449 = vpop.f32.mrf.mxu0
        %450 = vmatprep.mubr.f32.mxu0 0.0
        %451 = vmatmul.mubr.f32.gmra.mxu0 %v279
        %v452 = vpop.f32.mrf.mxu0
        %v453 = vadd.f32 0.0, %v452
        %v454 = vpop.f32.mrf.mxu0
        %455 = vmatprep.mubr.f32.mxu0 0.0
        %456 = vmatmul.mubr.f32.gmra.mxu0 %v282
        %v457 = vpop.f32.mrf.mxu0
        %v458 = vadd.f32 0.0, %v457
        %v459 = vpop.f32.mrf.mxu0
        %460 = vmatprep.mubr.f32.mxu0 0.0
        %461 = vmatmul.mubr.f32.gmra.mxu0 %v285
        %v462 = vpop.f32.mrf.mxu0
        %v463 = vadd.f32 0.0, %v462
        %v464 = vpop.f32.mrf.mxu0
        %465 = vmatprep.mubr.f32.mxu0 0.0
        %466 = vmatmul.mubr.f32.gmra.mxu0 %v288
        %v467 = vpop.f32.mrf.mxu0
        %v468 = vadd.f32 0.0, %v467
        %v469 = vpop.f32.mrf.mxu0
        %470 = vmatprep.mubr.f32.mxu0 0.0
        %471 = vmatmul.mubr.f32.gmra.mxu0 %v291
        %v472 = vpop.f32.mrf.mxu0
        %v473 = vadd.f32 0.0, %v472
        %v474 = vpop.f32.mrf.mxu0
        %475 = vmatprep.mubr.f32.mxu0 0.0
        %476 = vmatmul.mubr.f32.gmra.mxu0 %v294
        %v477 = vpop.f32.mrf.mxu0
        %v478 = vadd.f32 0.0, %v477
        %v479 = vpop.f32.mrf.mxu0
        %480 = vmatprep.mubr.f32.mxu0 0.0
        %481 = vmatmul.mubr.f32.gmra.mxu0 %v297
        %v482 = vpop.f32.mrf.mxu0
        %v483 = vadd.f32 0.0, %v482
        %v484 = vpop.f32.mrf.mxu0
        %485 = vmatprep.mubr.f32.mxu0 0.0
        %486 = vmatmul.mubr.f32.gmra.mxu0 %v300
        %v487 = vpop.f32.mrf.mxu0
        %v488 = vadd.f32 0.0, %v487
        %v489 = vpop.f32.mrf.mxu0
        %490 = vmatprep.mubr.f32.mxu0 0.0
        %491 = vmatmul.mubr.f32.gmra.mxu0 %v303
        %v492 = vpop.f32.mrf.mxu0
        %v493 = vadd.f32 0.0, %v492
        %v494 = vpop.f32.mrf.mxu0
        %495 = vmatprep.mubr.f32.mxu0 0.0
        %496 = vmatmul.mubr.f32.gmra.mxu0 %v306
        %v497 = vpop.f32.mrf.mxu0
        %v498 = vadd.f32 0.0, %v497
        %v499 = vpop.f32.mrf.mxu0
        %500 = vdwg.mxu0
        %v501 = vmul.f32 %v423, %v423
        %v502 = vmul.f32 %v428, %v428
        %v503 = vmul.f32 %v433, %v433
        %v504 = vmul.f32 %v438, %v438
        %v505 = vmul.f32 %v443, %v443
        %v506 = vmul.f32 %v448, %v448
        %v507 = vmul.f32 %v453, %v453
        %v508 = vmul.f32 %v458, %v458
        %v509 = vmul.f32 %v463, %v463
        %v510 = vmul.f32 %v468, %v468
        %v511 = vmul.f32 %v473, %v473
        %v512 = vmul.f32 %v478, %v478
        %v513 = vmul.f32 %v483, %v483
        %v514 = vmul.f32 %v488, %v488
        %v515 = vmul.f32 %v493, %v493
        %v516 = vmul.f32 %v498, %v498
        %517 = vmatprep.subr.mxu0 0.0
        %518 = vmatpush1.msra.mxu0 %v516
        %519 = vmatprep.subr.mxu0 0.0
        %520 = vmatpush1.msra.mxu0 %v515
        %521 = vmatprep.subr.mxu0 0.0
        %522 = vmatpush1.msra.mxu0 %v514
        %523 = vmatprep.subr.mxu0 0.0
        %524 = vmatpush1.msra.mxu0 %v513
        %525 = vmatprep.subr.mxu0 0.0
        %526 = vmatpush1.msra.mxu0 %v512
        %527 = vmatprep.subr.mxu0 0.0
        %528 = vmatpush1.msra.mxu0 %v511
        %529 = vmatprep.subr.mxu0 0.0
        %530 = vmatpush1.msra.mxu0 %v510
        %531 = vmatprep.subr.mxu0 0.0
        %532 = vmatpush1.msra.mxu0 %v509
        %533 = vmatprep.subr.mxu0 0.0
        %534 = vmatpush1.msra.mxu0 %v508
        %535 = vmatprep.subr.mxu0 0.0
        %536 = vmatpush1.msra.mxu0 %v507
        %537 = vmatprep.subr.mxu0 0.0
        %538 = vmatpush1.msra.mxu0 %v506
        %539 = vmatprep.subr.mxu0 0.0
        %540 = vmatpush1.msra.mxu0 %v505
        %541 = vmatprep.subr.mxu0 0.0
        %542 = vmatpush1.msra.mxu0 %v504
        %543 = vmatprep.subr.mxu0 0.0
        %544 = vmatpush1.msra.mxu0 %v503
        %545 = vmatprep.subr.mxu0 0.0
        %546 = vmatpush1.msra.mxu0 %v502
        %547 = vmatprep.subr.mxu0 0.0
        %548 = vmatpush1.msra.mxu0 %v501
        %549 = vmatprep.subr.mxu0 0.0
        %550 = vmatpush2.msra.mxu0 0.0
        %551 = vmatprep.subr.mxu0 0.0
        %552 = vmatpush2.msra.mxu0 0.0
        %553 = vmatprep.subr.mxu0 0.0
        %554 = vmatpush2.msra.mxu0 0.0
        %555 = vmatprep.subr.mxu0 0.0
        %556 = vmatpush2.msra.mxu0 0.0
        %557 = vmatprep.subr.mxu0 0.0
        %558 = vmatpush2.msra.mxu0 0.0
        %559 = vmatprep.subr.mxu0 0.0
        %560 = vmatpush2.msra.mxu0 0.0
        %561 = vmatprep.subr.mxu0 0.0
        %562 = vmatpush2.msra.mxu0 0.0
        %563 = vmatprep.subr.mxu0 0.0
        %564 = vmatpush2.msra.mxu0 0.0
        %565 = vmatprep.subr.mxu0 0.0
        %566 = vmatpush2.msra.mxu0 0.0
        %567 = vmatprep.subr.mxu0 0.0
        %568 = vmatpush2.msra.mxu0 0.0
        %569 = vmatprep.subr.mxu0 0.0
        %570 = vmatpush2.msra.mxu0 0.0
        %571 = vmatprep.subr.mxu0 0.0
        %572 = vmatpush2.msra.mxu0 0.0
        %573 = vmatprep.subr.mxu0 0.0
        %574 = vmatpush2.msra.mxu0 0.0
        %575 = vmatprep.subr.mxu0 0.0
        %576 = vmatpush2.msra.mxu0 0.0
        %577 = vmatprep.subr.mxu0 0.0
        %578 = vmatpush2.msra.mxu0 0.0
        %579 = vmatprep.subr.mxu0 0.0
        %580 = vmatpush2.msra.mxu0 0.0
        %581 = vmatprep.mubr.f32.mxu0 0.0
        %582 = vmatmul.mubr.f32.gmra.mxu0 %v256
        %v583 = vpop.f32.mrf.mxu0
        %v584 = vadd.f32 0.0, %v583
        %v585 = vpop.f32.mrf.mxu0
        %586 = vdwg.mxu0
        %v588 = vsel %vm259, %v257, 0
        %590 = vmatprep.subr.mxu0 0.0
        %591 = vmatpush1.xpose.msra.mxu0 %v354
        %592 = vmatprep.subr.mxu0 0.0
        %593 = vmatpush1.xpose.msra.mxu0 %v351
        %594 = vmatprep.subr.mxu0 0.0
        %595 = vmatpush1.xpose.msra.mxu0 %v348
        %596 = vmatprep.subr.mxu0 0.0
        %597 = vmatpush1.xpose.msra.mxu0 %v345
        %598 = vmatprep.subr.mxu0 0.0
        %599 = vmatpush1.xpose.msra.mxu0 %v342
        %600 = vmatprep.subr.mxu0 0.0
        %601 = vmatpush1.xpose.msra.mxu0 %v339
        %602 = vmatprep.subr.mxu0 0.0
        %603 = vmatpush1.xpose.msra.mxu0 %v336
        %604 = vmatprep.subr.mxu0 0.0
        %605 = vmatpush1.xpose.msra.mxu0 %v333
        %606 = vmatprep.subr.mxu0 0.0
        %607 = vmatpush1.xpose.msra.mxu0 %v330
        %608 = vmatprep.subr.mxu0 0.0
        %609 = vmatpush1.xpose.msra.mxu0 %v327
        %610 = vmatprep.subr.mxu0 0.0
        %611 = vmatpush1.xpose.msra.mxu0 %v324
        %612 = vmatprep.subr.mxu0 0.0
        %613 = vmatpush1.xpose.msra.mxu0 %v321
        %614 = vmatprep.subr.mxu0 0.0
        %615 = vmatpush1.xpose.msra.mxu0 %v318
        %616 = vmatprep.subr.mxu0 0.0
        %617 = vmatpush1.xpose.msra.mxu0 %v315
        %618 = vmatprep.subr.mxu0 0.0
        %619 = vmatpush1.xpose.msra.mxu0 %v312
        %620 = vmatprep.subr.mxu0 0.0
        %621 = vmatpush1.xpose.msra.mxu0 %v309
        %622 = vmatprep.subr.mxu0 0.0
        %623 = vmatpush2.xpose.msra.mxu0 0.0
        %624 = vmatprep.subr.mxu0 0.0
        %625 = vmatpush2.xpose.msra.mxu0 0.0
        %626 = vmatprep.subr.mxu0 0.0
        %627 = vmatpush2.xpose.msra.mxu0 0.0
        %628 = vmatprep.subr.mxu0 0.0
        %629 = vmatpush2.xpose.msra.mxu0 0.0
        %630 = vmatprep.subr.mxu0 0.0
        %631 = vmatpush2.xpose.msra.mxu0 0.0
        %632 = vmatprep.subr.mxu0 0.0
        %633 = vmatpush2.xpose.msra.mxu0 0.0
        %634 = vmatprep.subr.mxu0 0.0
        %635 = vmatpush2.xpose.msra.mxu0 0.0
        %636 = vmatprep.subr.mxu0 0.0
        %637 = vmatpush2.xpose.msra.mxu0 0.0
        %638 = vmatprep.subr.mxu0 0.0
        %639 = vmatpush2.xpose.msra.mxu0 0.0
        %640 = vmatprep.subr.mxu0 0.0
        %641 = vmatpush2.xpose.msra.mxu0 0.0
        %642 = vmatprep.subr.mxu0 0.0
        %643 = vmatpush2.xpose.msra.mxu0 0.0
        %644 = vmatprep.subr.mxu0 0.0
        %645 = vmatpush2.xpose.msra.mxu0 0.0
        %646 = vmatprep.subr.mxu0 0.0
        %647 = vmatpush2.xpose.msra.mxu0 0.0
        %648 = vmatprep.subr.mxu0 0.0
        %649 = vmatpush2.xpose.msra.mxu0 0.0
        %650 = vmatprep.subr.mxu0 0.0
        %651 = vmatpush2.xpose.msra.mxu0 0.0
        %652 = vmatprep.subr.mxu0 0.0
        %653 = vmatpush2.xpose.msra.mxu0 0.0
        %654 = vmatprep.mubr.f32.mxu0 0.0
        %655 = vmatmul.mubr.f32.gmra.mxu0 %v588
        %v656 = vpop.f32.mrf.mxu0
        %v657 = vadd.f32 0.0, %v656
        %v658 = vpop.f32.mrf.mxu0
        %659 = vdwg.mxu0
        %v660 = vsub.f32 %v657, %v584
        %662 = vset.pattern.permute.xlu0 0
        %663 = vperm.xlu0 %662, %v258
        %v664 = vpop.permute.xlu0 %663
        %v666 = vadd.f32 %v660, %v664
        %v667 = vrot.slane %v666, 4
        %v668 = vmax.f32 %v666, %v667
        %v669 = vrot.slane %v668, 2
        %v670 = vmax.f32 %v668, %v669
        %v671 = vrot.slane %v670, 1
        %v672 = vmax.f32 %v670, %v671
        %v673 = vsub.f32 %v666, %v672
        %v674 = vmul.f32 %v673, 1.442695
        %v675 = vpow.pop %v674
        %v676 = vrot.slane %v675, 4
        %v677 = vadd.f32 %v675, %v676
        %v678 = vrot.slane %v677, 2
        %v679 = vadd.f32 %v677, %v678
        %v680 = vrot.slane %v679, 1
        %v681 = vadd.f32 %v679, %v680
        %v682 = vlog2.pop %v681
        %v683 = vmul.f32 %v682, 0.6931472
        %v684 = vadd.f32 %v672, %v683
        %685 = vst [vmem:[%s217] sm:$0x1] %v684
        %s686 = sand.u32 %s137, 1
        %s687 = scalar_lea.sflag [#allocation3], %s686
        %s688 = sand.u32 %s137, 1
        %s689 = scalar_lea.vmem [#allocation2], %s688
        // Predicated region
        $region41: #{tpu_custom_call.1} parent=39 // pred_check
          %p690 = pneg %p147
        $region42: #{tpu_custom_call.1} parent=39 // pred_check_branch
          %692 = sbr.rel (%p690) target = $region44
        $region43: #{tpu_custom_call.1} parent=39 // pred_region
          %s694 = ssub.s32 16, 16
          %695 = vsyncadd %s687, %s694
          %s696 = smul.addr %s19, 16
          %s697 = scalar_lea.hbm %s5, %s696
          %s699 = sshll.u32 %s689, 4
          %s700 = int_to_ptr.vmem [resolvable:$true] %s699
          %702 = dma.vmem_to_hbm [thread:$0]  %s700, 16, %s697, %s687
        $region44: #{tpu_custom_call.1} parent=39 // pred_fallthru
          _
      $region40: #{tpu_custom_call.1} parent=5 // pred_fallthru
        _
      %p703 = scmp.le.s32.totalorder 2, %s14
      // Predicated region
      $region45: #{tpu_custom_call.1} parent=5 // pred_check
        %p704 = pneg %p703
      $region46: #{tpu_custom_call.1} parent=5 // pred_check_branch
        %706 = sbr.rel (%p704) target = $region48
      $region47: #{tpu_custom_call.1} parent=5 // pred_region
        %s707 = ssub.s32 %s14, 2
        // Predicated region
        $region49: #{tpu_custom_call.1} parent=47 // pred_check
          %p708 = pneg %p153
        $region50: #{tpu_custom_call.1} parent=47 // pred_check_branch
          %710 = sbr.rel (%p708) target = $region52
        $region51: #{tpu_custom_call.1} parent=47 // pred_region
          %s711 = sand.u32 %s138, 1
          %s712 = scalar_lea.sflag [#allocation3], %s711
          %s713 = sand.u32 %s138, 1
          %s714 = scalar_lea.vmem [#allocation2], %s713
          %715 = dma.done %s712, 16
        $region52: #{tpu_custom_call.1} parent=47 // pred_fallthru
          _
      $region48: #{tpu_custom_call.1} parent=5 // pred_fallthru
        _
    $region6: #{tpu_custom_call.1} parent=1 // loop_footer
      %s18 = sadd.s32 1, %s14
    $region7: #{tpu_custom_call.1} parent=1 // loop_footer_branch
      %13 = sbr.rel target = $region3
    $region8: #{tpu_custom_call.1} parent=1 // loop_exit
      _
    %716 = vsyncpa [#allocation3], 1
    %s717 = scalar_lea.sflag [#allocation3], 1
    %718 = vsyncpa %s717, 1

</llo_original>
